<compile_context>
chip_gen: v6e
topology: v6e:2x2x1
jax: 0.10.0
libtpu: 0.0.40
codegen_flags: <defaults>
</compile_context>

<pallas_src>
import functools

import jax
import jax.numpy as jnp
from jax.experimental import pallas as pl
from jax.experimental.pallas import tpu as pltpu


def _round_up(x, m):
    return ((x + m - 1) // m) * m


def _pad2(a, rows, cols):
    return jnp.pad(a, ((0, rows - a.shape[0]), (0, cols - a.shape[1])))


# ---------------------------------------------------------------------------
# Kernel
# ---------------------------------------------------------------------------
def _action_network_kernel(n_layers, group_dim, x_ref, *refs):
    """refs = (w0, b0, ..., w_{n_layers}, b_{n_layers}, o_ref).

    group_dim is the power-of-two padded action_dim; output columns are laid
    out as action groups of `group_dim` consecutive lanes.
    """
    o_ref = refs[-1]
    params = refs[:-1]

    # ---- feature extractor: n_layers x (Linear + ReLU) ----------------------
    h = x_ref[...]                                    # (TB, S_p) compute dtype
    for i in range(n_layers):
        w = params[2 * i][...]                        # (in_p, out_p) bf16
        b = params[2 * i + 1][...]                    # (1,  out_p)   f32
        acc = jnp.dot(h, w, preferred_element_type=jnp.float32) + b
        h = jnp.maximum(acc, 0.0).astype(w.dtype)     # ReLU in f32 -> bf16

    # ---- action head ---------------------------------------------------------
    w_o = params[2 * n_layers][...]
    b_o = params[2 * n_layers + 1][...]
    logits = jnp.dot(h, w_o, preferred_element_type=jnp.float32) + b_o  # (TB, O_p) f32

    TB, L = logits.shape
    D = group_dim
    out_dtype = o_ref.dtype

    if D >= 128:
        # Groups are one or more whole vregs wide: per-group XLU reductions,
        # 128-lane-aligned unmasked stores.
        for a in range(L // D):
            sl = logits[:, a * D:(a + 1) * D]
            m = jnp.max(sl, axis=-1, keepdims=True)
            centered = sl - m
            lse = jnp.log(jnp.sum(jnp.exp(centered), axis=-1, keepdims=True))
            o_ref[:, a * D:(a + 1) * D] = (centered - lse).astype(out_dtype)
        return

    # Lane-dense segmented log_softmax over contiguous groups of D lanes,
    # processed per 128-lane chunk so every roll is an intra-vreg lane rotate.
    # Padded lanes carry -1e30 bias (exp underflows to exactly 0) and padded
    # tail groups hold zero logits; both are sliced off in the wrapper, so no
    # masked stores are needed.
    W = 128
    lane = jax.lax.broadcasted_iota(jnp.int32, (TB, W), 1)
    pos = jnp.bitwise_and(lane, D - 1)                # lane index within a group

    # Hoisted roll shifts + select masks, shared by the max pass, the sum pass
    # and every 128-lane chunk.
    shifts, masks = [], []
    s = 1
    while s < D:
        shifts.append(s)
        masks.append(pos < (D - s))
        s *= 2

    def seg_allreduce(y, combine):
        # Cyclic recursive doubling within each group of D lanes.
        for sh, msk in zip(shifts, masks):
            fwd = pltpu.roll(y, W - sh, axis=1)       # y[:, j + sh]
            bwd = pltpu.roll(y, D - sh, axis=1)       # y[:, j - (D - sh)]
            y = combine(y, jnp.where(msk, fwd, bwd))
        return y

    for c in range(L // W):
        chunk = logits[:, c * W:(c + 1) * W]
        m = seg_allreduce(chunk, jnp.maximum)         # per-group max
        centered = chunk - m                          # reused for exp and store
        ssum = seg_allreduce(jnp.exp(centered), jnp.add)
        o_ref[:, c * W:(c + 1) * W] = (centered - jnp.log(ssum)).astype(out_dtype)


# ---------------------------------------------------------------------------
# Capability probe: single-buffered resident weights (pl.Buffered(1))
# ---------------------------------------------------------------------------
_SINGLE_BUFFER_OK = None


def _single_buffer_supported():
    global _SINGLE_BUFFER_OK
    if _SINGLE_BUFFER_OK is None:
        def probe(w_ref, o_ref):
            o_ref[...] = w_ref[...] + 1.0

        try:
            out = pl.pallas_call(
                probe,
                out_shape=jax.ShapeDtypeStruct((16, 128), jnp.float32),
                grid=(2,),
                in_specs=[pl.BlockSpec((8, 128), lambda i: (0, 0),
                                       pipeline_mode=pl.Buffered(1))],
                out_specs=pl.BlockSpec((8, 128), lambda i: (i, 0)),
            )(jnp.zeros((8, 128), jnp.float32))
            jax.block_until_ready(out)
            _SINGLE_BUFFER_OK = True
        except Exception:
            _SINGLE_BUFFER_OK = False
    return _SINGLE_BUFFER_OK


# ---------------------------------------------------------------------------
# One-time parameter preparation (hoisted out of the per-call path)
# ---------------------------------------------------------------------------
def prepare_action_network(params, *, action_num, action_dim,
                           compute_dtype=jnp.bfloat16):
    """params: [(w0, b0), ..., (w_out, b_out)] with w: (in, out) == W.T.

    Pads every feature dim to a 128-lane multiple and casts weights to the
    compute dtype once.  Output-head columns are regrouped so each action
    group occupies group_dim = next_power_of_2(action_dim) consecutive lanes;
    padded lanes get zero weights and a -1e30 bias.
    """
    n_layers = len(params) - 1
    state_dim = params[0][0].shape[0]
    group_dim = max(int(pl.next_power_of_2(max(action_dim, 1))), 1)

    s_p = _round_up(state_dim, 128)
    flat, layer_cols = [], []
    prev = s_p
    for w, b in params[:-1]:
        w = jnp.asarray(w, jnp.float32)
        b = jnp.asarray(b, jnp.float32).reshape(1, -1)
        cols = _round_up(w.shape[1], 128)
        flat.append(_pad2(w, prev, cols).astype(compute_dtype))   # bf16 weights
        flat.append(_pad2(b, 1, cols))                            # f32 bias
        layer_cols.append(cols)
        prev = cols

    w_o, b_o = params[-1]
    w_o = jnp.asarray(w_o, jnp.float32)
    b_o = jnp.asarray(b_o, jnp.float32).reshape(1, -1)
    hidden = w_o.shape[0]
    o_grp = action_num * group_dim
    o_p = _round_up(o_grp, 128)
    pad_d = group_dim - action_dim
    w3 = jnp.pad(w_o.reshape(hidden, action_num, action_dim),
                 ((0, 0), (0, 0), (0, pad_d)))
    b3 = jnp.pad(b_o.reshape(1, action_num, action_dim),
                 ((0, 0), (0, 0), (0, pad_d)), constant_values=-1e30)
    flat.append(_pad2(w3.reshape(hidden, o_grp), prev, o_p).astype(compute_dtype))
    flat.append(_pad2(b3.reshape(1, o_grp), 1, o_p))
    layer_cols.append(o_p)

    meta = dict(n_layers=n_layers, action_num=action_num, action_dim=action_dim,
                group_dim=group_dim, state_dim=state_dim, s_p=s_p, o_p=o_p,
                layer_cols=tuple(layer_cols))
    return flat, meta


# ---------------------------------------------------------------------------
# Generation-aware VMEM budgeting + batch-tile selection
# ---------------------------------------------------------------------------
def _vmem_budget_bytes():
    try:
        cap = int(pltpu.get_tpu_info().vmem_capacity_bytes)
    except Exception:
        cap = 64 * 1024 * 1024          # conservative: v7x per-TensorCore VMEM
    return (cap // 8) * 7               # ~56 MiB on v7x, ~112 MiB on v5e/v6e


def _resident_weight_bytes(s_p, layer_cols, weight_itemsize, buffer_count):
    total, prev = 0, s_p
    for cols in layer_cols:
        total += prev * cols * weight_itemsize * buffer_count   # weight tile
        total += 8 * cols * 4 * buffer_count                    # bias (8-sublane pad)
        prev = cols
    return total


def _choose_batch_tile(batch, s_p, o_p, layer_cols, block_batch,
                       in_itemsize, out_itemsize, resident_bytes, budget):
    b32 = _round_up(max(batch, 1), 32)
    cap_tb = min(_round_up(block_batch, 32), b32)

    # Streamed tiles are double buffered; add the dominant in-kernel f32
    # temporaries (logits/centered + widest activation) per batch row.
    widest = max([s_p] + list(layer_cols))
    per_row = (2 * s_p * in_itemsize + 2 * o_p * out_itemsize
               + 2 * o_p * 4 + widest * 4)
    avail = budget - resident_bytes - (4 << 20)      # slack for compiler scratch
    tb_budget = max(avail // per_row, 32)
    if tb_budget >= 256:
        tb_budget = tb_budget // 256 * 256           # MXU-friendly row counts
    else:
        tb_budget = tb_budget // 32 * 32
    tb = max(32, min(cap_tb, int(tb_budget)))

    # Guarantee >=2 grid steps for large batches so ("parallel",) can shard the
    # batch across both v7x TensorCores (one cheap extra step on v5e/v6e).
    if b32 >= 512 and _round_up(batch, tb) // tb < 2:
        tb = _round_up(pl.cdiv(b32, 2), 32)
    b_p = _round_up(batch, tb)
    return tb, b_p


# ---------------------------------------------------------------------------
# Forward
# ---------------------------------------------------------------------------
def _apply(state, *flat_params, meta, block_batch, out_dtype, compute_dtype,
           single_buffer_weights):
    n_layers = meta["n_layers"]
    action_num = meta["action_num"]
    action_dim = meta["action_dim"]
    group_dim = meta["group_dim"]
    state_dim = meta["state_dim"]
    s_p = meta["s_p"]
    o_p = meta["o_p"]
    layer_cols = meta["layer_cols"]

    batch = state.shape[0]
    in_item = jnp.dtype(compute_dtype).itemsize
    out_item = jnp.dtype(out_dtype).itemsize
    wbuf = 1 if single_buffer_weights else 2
    budget = _vmem_budget_bytes()
    resident = _resident_weight_bytes(s_p, layer_cols, in_item, wbuf)
    tb, b_p = _choose_batch_tile(batch, s_p, o_p, layer_cols, block_batch,
                                 in_item, out_item, resident, budget)

    # Pad/cast the input only when actually needed (skips wrapper HBM passes
    # when the caller's shapes are already aligned).
    x = state
    if b_p != batch or s_p != state_dim:
        x = jnp.pad(x, ((0, b_p - batch), (0, s_p - state_dim)))
    if x.dtype != compute_dtype:
        x = x.astype(compute_dtype)

    # Weights/biases: whole-array blocks with constant index_maps -> they stay
    # VMEM-resident across the batch grid; single-buffered when supported.
    wkw = dict(pipeline_mode=pl.Buffered(1)) if single_buffer_weights else {}
    in_specs = [pl.BlockSpec((tb, s_p), lambda i: (i, 0))]
    for p in flat_params:
        in_specs.append(pl.BlockSpec(p.shape, lambda i: (0, 0), **wkw))

    kernel = functools.partial(_action_network_kernel, n_layers, group_dim)

    out_padded = pl.pallas_call(
        kernel,
        out_shape=jax.ShapeDtypeStruct((b_p, o_p), out_dtype),
        grid=(b_p // tb,),
        in_specs=in_specs,
        out_specs=pl.BlockSpec((tb, o_p), lambda i: (i, 0)),
        compiler_params=pltpu.CompilerParams(
            dimension_semantics=("parallel",),
            vmem_limit_bytes=int(budget),
        ),
    )(x, *flat_params)

    o_grp = action_num * group_dim
    out = out_padded
    if b_p != batch:
        out = out[:batch]
    if o_p != o_grp:
        out = out[:, :o_grp]
    out = out.reshape(batch, action_num, group_dim)
    if group_dim != action_dim:
        out = out[..., :action_dim]
    return out


def make_action_network_forward(params, *, action_num, action_dim,
                                block_batch=1024, compute_dtype=jnp.bfloat16,
                                out_dtype=jnp.float32):
    """Prepare (pad/cast) parameters once and return a jitted forward(state)
    producing (batch, action_num, action_dim) log-probs."""
    flat, meta = prepare_action_network(params, action_num=action_num,
                                        action_dim=action_dim,
                                        compute_dtype=compute_dtype)
    single_buffer = _single_buffer_supported()
    apply_fn = jax.jit(functools.partial(
        _apply, meta=meta, block_batch=block_batch, out_dtype=out_dtype,
        compute_dtype=compute_dtype, single_buffer_weights=single_buffer))

    def forward(state):
        return apply_fn(state, *flat)

    return forward


def action_network_forward(state, params, *, action_num, action_dim,
                           block_batch=1024, compute_dtype=jnp.bfloat16,
                           out_dtype=jnp.float32):
    """One-shot convenience wrapper (re-pads params every call; prefer
    make_action_network_forward for repeated use)."""
    flat, meta = prepare_action_network(params, action_num=action_num,
                                        action_dim=action_dim,
                                        compute_dtype=compute_dtype)
    return _apply(state, *flat, meta=meta, block_batch=block_batch,
                  out_dtype=out_dtype, compute_dtype=compute_dtype,
                  single_buffer_weights=_single_buffer_supported())


# ---------------------------------------------------------------------------
# Init + pure-jnp reference (for the self-test)
# ---------------------------------------------------------------------------
def init_params(key, state_dim, action_num, action_dim, hidden_dim, n_layers):
    """Deterministic init mirroring nn.Linear shapes (stored transposed)."""
    dims = [state_dim] + [hidden_dim] * n_layers
    params = []
    keys = jax.random.split(key, n_layers + 1)
    for i in range(n_layers):
        kin, kout = dims[i], dims[i + 1]
        bound = 1.0 / jnp.sqrt(kin)
        kw, kb = jax.random.split(keys[i])
        w = jax.random.uniform(kw, (kin, kout), jnp.float32, -bound, bound)
        b = jax.random.uniform(kb, (1, kout), jnp.float32, -bound, bound)
        params.append((w, b))
    kin, kout = hidden_dim, action_num * action_dim
    bound = 1.0 / jnp.sqrt(kin)
    kw, kb = jax.random.split(keys[-1])
    w = jax.random.uniform(kw, (kin, kout), jnp.float32, -bound, bound)
    b = jax.random.uniform(kb, (1, kout), jnp.float32, -bound, bound)
    params.append((w, b))
    return params


def reference_forward(state, params, *, action_num, action_dim,
                      compute_dtype=None):
    """Pure-jnp reference; compute_dtype=bf16 matches the kernel's matmul
    quantization, compute_dtype=None is the full-f32 PyTorch equivalent."""
    def cast(a):
        return a.astype(compute_dtype) if compute_dtype is not None else a

    h = state
    for w, b in params[:-1]:
        h = jnp.maximum(
            jnp.dot(cast(h), cast(w), preferred_element_type=jnp.float32) + b,
            0.0)
    w, b = params[-1]
    logits = (jnp.dot(cast(h), cast(w), preferred_element_type=jnp.float32) + b
              ).reshape(-1, action_num, action_dim)
    return jax.nn.log_softmax(logits, axis=2)


if __name__ == "__main__":
    key = jax.random.PRNGKey(0)

    def check(state_dim, hidden_dim, n_layers, action_num, action_dim, batch):
        k_params, k_state = jax.random.split(
            jax.random.fold_in(key, 1000 * action_num + action_dim))
        params = init_params(k_params, state_dim, action_num, action_dim,
                             hidden_dim, n_layers)
        state = jax.random.normal(k_state, (batch, state_dim), jnp.float32)

        fwd = make_action_network_forward(params, action_num=action_num,
                                          action_dim=action_dim)
        out = jax.block_until_ready(fwd(state))
        assert out.shape == (batch, action_num, action_dim)

        ref_bf16 = reference_forward(state, params, action_num=action_num,
                                     action_dim=action_dim,
                                     compute_dtype=jnp.bfloat16)
        ref_f32 = reference_forward(state, params, action_num=action_num,
                                    action_dim=action_dim, compute_dtype=None)
        assert jnp.allclose(out, ref_bf16, atol=1e-3, rtol=1e-3), \
            float(jnp.max(jnp.abs(out - ref_bf16)))
        assert jnp.allclose(out, ref_f32, atol=5e-2, rtol=5e-2), \
            float(jnp.max(jnp.abs(out - ref_f32)))

    # power-of-two action_dim: intra-vreg segmented-roll log_softmax path
    check(state_dim=16, hidden_dim=32, n_layers=2, action_num=4, action_dim=8,
          batch=2)
    # non-power-of-two action_dim: groups padded to 8, same lane-dense path
    check(state_dim=16, hidden_dim=32, n_layers=2, action_num=3, action_dim=6,
          batch=2)
    # action_dim >= 128: per-group aligned-reduction path
    check(state_dim=16, hidden_dim=32, n_layers=1, action_num=2, action_dim=128,
          batch=2)

    print("KERNEL_OK")
</pallas_src>

<mosaic_0001>
module attributes {stable_mosaic.version = 11 : i64} {
  func.func @probe(%arg0: i32, %arg1: memref<8x128xf32, #tpu.memory_space<vmem>>, %arg2: memref<8x128xf32, #tpu.memory_space<vmem>>) attributes {dimension_semantics = [#tpu.dimension_semantics<arbitrary>], iteration_bounds = array<i64: 2>, scalar_prefetch = 0 : i64, scratch_operands = 0 : i64, tpu.core_type = #tpu.core_type<tc>, window_params = [{pipeline_mode = #tpu.pipeline_mode<synchronous>, transform_indices = @transform_0, window_bounds = array<i64: 8, 128>}, {transform_indices = @transform_1, window_bounds = array<i64: 8, 128>}]} {
    %c0 = arith.constant 0 : index
    %c0_0 = arith.constant 0 : index
    %0 = vector.load %arg1[%c0, %c0_0] : memref<8x128xf32, #tpu.memory_space<vmem>>, vector<8x128xf32>
    %cst = arith.constant 1.000000e+00 : f32
    %1 = vector.broadcast %cst : f32 to vector<8x128xf32>
    %2 = arith.addf %0, %1 : vector<8x128xf32>
    %c0_1 = arith.constant 0 : index
    %c0_2 = arith.constant 0 : index
    %3 = vector.load %arg2[%c0_1, %c0_2] : memref<8x128xf32, #tpu.memory_space<vmem>>, vector<8x128xf32>
    tpu.vector_store %arg2[%c0_1, %c0_2], %2 {strides = array<i32>} : memref<8x128xf32, #tpu.memory_space<vmem>>, vector<8x128xf32>,
    return
  }
  func.func @transform_0(%arg0: i32) -> (i32, i32) {
    %c0_i32 = arith.constant 0 : i32
    %c0_i32_0 = arith.constant 0 : i32
    %c0_i32_1 = arith.constant 0 : i32
    return %c0_i32, %c0_i32_0 : i32, i32
  }
  func.func @transform_1(%arg0: i32) -> (i32, i32) {
    %c0_i32 = arith.constant 0 : i32
    %c0_i32_0 = arith.constant 0 : i32
    return %arg0, %c0_i32 : i32, i32
  }
}

module attributes {stable_mosaic.version = 11 : i64} {
  func.func @_action_network_kernel(%arg0: i32, %arg1: memref<32x128xbf16, #tpu.memory_space<vmem>>, %arg2: memref<128x128xbf16, #tpu.memory_space<vmem>>, %arg3: memref<1x128xf32, #tpu.memory_space<vmem>>, %arg4: memref<128x128xbf16, #tpu.memory_space<vmem>>, %arg5: memref<1x128xf32, #tpu.memory_space<vmem>>, %arg6: memref<128x128xbf16, #tpu.memory_space<vmem>>, %arg7: memref<1x128xf32, #tpu.memory_space<vmem>>, %arg8: memref<32x128xf32, #tpu.memory_space<vmem>>) attributes {dimension_semantics = [#tpu.dimension_semantics<parallel>], iteration_bounds = array<i64: 1>, scalar_prefetch = 0 : i64, scratch_operands = 0 : i64, tpu.core_type = #tpu.core_type<tc>, window_params = [{transform_indices = @transform_0, window_bounds = array<i64: 32, 128>}, {pipeline_mode = #tpu.pipeline_mode<synchronous>, transform_indices = @transform_1, window_bounds = array<i64: 128, 128>}, {pipeline_mode = #tpu.pipeline_mode<synchronous>, transform_indices = @transform_2, window_bounds = array<i64: 1, 128>}, {pipeline_mode = #tpu.pipeline_mode<synchronous>, transform_indices = @transform_3, window_bounds = array<i64: 128, 128>}, {pipeline_mode = #tpu.pipeline_mode<synchronous>, transform_indices = @transform_4, window_bounds = array<i64: 1, 128>}, {pipeline_mode = #tpu.pipeline_mode<synchronous>, transform_indices = @transform_5, window_bounds = array<i64: 128, 128>}, {pipeline_mode = #tpu.pipeline_mode<synchronous>, transform_indices = @transform_6, window_bounds = array<i64: 1, 128>}, {transform_indices = @transform_7, window_bounds = array<i64: 32, 128>}]} {
    %c0 = arith.constant 0 : index
    %c0_0 = arith.constant 0 : index
    %0 = vector.load %arg1[%c0, %c0_0] : memref<32x128xbf16, #tpu.memory_space<vmem>>, vector<32x128xbf16>
    %c0_1 = arith.constant 0 : index
    %c0_2 = arith.constant 0 : index
    %1 = vector.load %arg2[%c0_1, %c0_2] : memref<128x128xbf16, #tpu.memory_space<vmem>>, vector<128x128xbf16>
    %c0_3 = arith.constant 0 : index
    %c0_4 = arith.constant 0 : index
    %2 = vector.load %arg3[%c0_3, %c0_4] : memref<1x128xf32, #tpu.memory_space<vmem>>, vector<1x128xf32>
    %cst = arith.constant dense<0.000000e+00> : vector<32x128xf32>
    %3 = tpu.matmul %0, %1, %cst {dimension_numbers = #tpu.dot_dimension_numbers<[1], [0], [0], [1], [0, 0, 1, 1], [], []>} : vector<32x128xbf16>, vector<128x128xbf16>, vector<32x128xf32> -> vector<32x128xf32>
    %4 = vector.broadcast %2 : vector<1x128xf32> to vector<32x128xf32>
    %5 = arith.addf %3, %4 : vector<32x128xf32>
    %cst_5 = arith.constant 0.000000e+00 : f32
    %6 = vector.broadcast %cst_5 : f32 to vector<32x128xf32>
    %7 = arith.maximumf %5, %6 : vector<32x128xf32>
    %8 = arith.truncf %7 : vector<32x128xf32> to vector<32x128xbf16>
    %c0_6 = arith.constant 0 : index
    %c0_7 = arith.constant 0 : index
    %9 = vector.load %arg4[%c0_6, %c0_7] : memref<128x128xbf16, #tpu.memory_space<vmem>>, vector<128x128xbf16>
    %c0_8 = arith.constant 0 : index
    %c0_9 = arith.constant 0 : index
    %10 = vector.load %arg5[%c0_8, %c0_9] : memref<1x128xf32, #tpu.memory_space<vmem>>, vector<1x128xf32>
    %cst_10 = arith.constant dense<0.000000e+00> : vector<32x128xf32>
    %11 = tpu.matmul %8, %9, %cst_10 {dimension_numbers = #tpu.dot_dimension_numbers<[1], [0], [0], [1], [0, 0, 1, 1], [], []>} : vector<32x128xbf16>, vector<128x128xbf16>, vector<32x128xf32> -> vector<32x128xf32>
    %12 = vector.broadcast %10 : vector<1x128xf32> to vector<32x128xf32>
    %13 = arith.addf %11, %12 : vector<32x128xf32>
    %cst_11 = arith.constant 0.000000e+00 : f32
    %14 = vector.broadcast %cst_11 : f32 to vector<32x128xf32>
    %15 = arith.maximumf %13, %14 : vector<32x128xf32>
    %16 = arith.truncf %15 : vector<32x128xf32> to vector<32x128xbf16>
    %c0_12 = arith.constant 0 : index
    %c0_13 = arith.constant 0 : index
    %17 = vector.load %arg6[%c0_12, %c0_13] : memref<128x128xbf16, #tpu.memory_space<vmem>>, vector<128x128xbf16>
    %c0_14 = arith.constant 0 : index
    %c0_15 = arith.constant 0 : index
    %18 = vector.load %arg7[%c0_14, %c0_15] : memref<1x128xf32, #tpu.memory_space<vmem>>, vector<1x128xf32>
    %cst_16 = arith.constant dense<0.000000e+00> : vector<32x128xf32>
    %19 = tpu.matmul %16, %17, %cst_16 {dimension_numbers = #tpu.dot_dimension_numbers<[1], [0], [0], [1], [0, 0, 1, 1], [], []>} : vector<32x128xbf16>, vector<128x128xbf16>, vector<32x128xf32> -> vector<32x128xf32>
    %20 = vector.broadcast %18 : vector<1x128xf32> to vector<32x128xf32>
    %21 = arith.addf %19, %20 : vector<32x128xf32>
    %22 = tpu.iota {dimensions = array<i32: 1>} : vector<32x128xi32>
    %c7_i32 = arith.constant 7 : i32
    %23 = vector.broadcast %c7_i32 : i32 to vector<32x128xi32>
    %24 = arith.andi %22, %23 : vector<32x128xi32>
    %c7_i32_17 = arith.constant 7 : i32
    %25 = vector.broadcast %c7_i32_17 : i32 to vector<32x128xi32>
    %26 = arith.cmpi slt, %24, %25 : vector<32x128xi32>
    %c6_i32 = arith.constant 6 : i32
    %27 = vector.broadcast %c6_i32 : i32 to vector<32x128xi32>
    %28 = arith.cmpi slt, %24, %27 : vector<32x128xi32>
    %c4_i32 = arith.constant 4 : i32
    %29 = vector.broadcast %c4_i32 : i32 to vector<32x128xi32>
    %30 = arith.cmpi slt, %24, %29 : vector<32x128xi32>
    %c127_i32 = arith.constant 127 : i32
    %31 = tpu.dynamic_rotate %21 by %c127_i32 dim 1 : vector<32x128xf32>, i32 -> vector<32x128xf32>
    %c7_i32_18 = arith.constant 7 : i32
    %32 = tpu.dynamic_rotate %21 by %c7_i32_18 dim 1 : vector<32x128xf32>, i32 -> vector<32x128xf32>
    %33 = arith.select %26, %31, %32 : vector<32x128xi1>, vector<32x128xf32>
    %34 = arith.maximumf %21, %33 : vector<32x128xf32>
    %c126_i32 = arith.constant 126 : i32
    %35 = tpu.dynamic_rotate %34 by %c126_i32 dim 1 : vector<32x128xf32>, i32 -> vector<32x128xf32>
    %c6_i32_19 = arith.constant 6 : i32
    %36 = tpu.dynamic_rotate %34 by %c6_i32_19 dim 1 : vector<32x128xf32>, i32 -> vector<32x128xf32>
    %37 = arith.select %28, %35, %36 : vector<32x128xi1>, vector<32x128xf32>
    %38 = arith.maximumf %34, %37 : vector<32x128xf32>
    %c124_i32 = arith.constant 124 : i32
    %39 = tpu.dynamic_rotate %38 by %c124_i32 dim 1 : vector<32x128xf32>, i32 -> vector<32x128xf32>
    %c4_i32_20 = arith.constant 4 : i32
    %40 = tpu.dynamic_rotate %38 by %c4_i32_20 dim 1 : vector<32x128xf32>, i32 -> vector<32x128xf32>
    %41 = arith.select %30, %39, %40 : vector<32x128xi1>, vector<32x128xf32>
    %42 = arith.maximumf %38, %41 : vector<32x128xf32>
    %43 = arith.subf %21, %42 : vector<32x128xf32>
    %44 = math.exp %43 : vector<32x128xf32>
    %c127_i32_21 = arith.constant 127 : i32
    %45 = tpu.dynamic_rotate %44 by %c127_i32_21 dim 1 : vector<32x128xf32>, i32 -> vector<32x128xf32>
    %c7_i32_22 = arith.constant 7 : i32
    %46 = tpu.dynamic_rotate %44 by %c7_i32_22 dim 1 : vector<32x128xf32>, i32 -> vector<32x128xf32>
    %47 = arith.select %26, %45, %46 : vector<32x128xi1>, vector<32x128xf32>
    %48 = arith.addf %44, %47 : vector<32x128xf32>
    %c126_i32_23 = arith.constant 126 : i32
    %49 = tpu.dynamic_rotate %48 by %c126_i32_23 dim 1 : vector<32x128xf32>, i32 -> vector<32x128xf32>
    %c6_i32_24 = arith.constant 6 : i32
    %50 = tpu.dynamic_rotate %48 by %c6_i32_24 dim 1 : vector<32x128xf32>, i32 -> vector<32x128xf32>
    %51 = arith.select %28, %49, %50 : vector<32x128xi1>, vector<32x128xf32>
    %52 = arith.addf %48, %51 : vector<32x128xf32>
    %c124_i32_25 = arith.constant 124 : i32
    %53 = tpu.dynamic_rotate %52 by %c124_i32_25 dim 1 : vector<32x128xf32>, i32 -> vector<32x128xf32>
    %c4_i32_26 = arith.constant 4 : i32
    %54 = tpu.dynamic_rotate %52 by %c4_i32_26 dim 1 : vector<32x128xf32>, i32 -> vector<32x128xf32>
    %55 = arith.select %30, %53, %54 : vector<32x128xi1>, vector<32x128xf32>
    %56 = arith.addf %52, %55 : vector<32x128xf32>
    %57 = math.log %56 : vector<32x128xf32>
    %58 = arith.subf %43, %57 : vector<32x128xf32>
    %c0_27 = arith.constant 0 : index
    %c0_28 = arith.constant 0 : index
    %59 = vector.load %arg8[%c0_27, %c0_28] : memref<32x128xf32, #tpu.memory_space<vmem>>, vector<32x128xf32>
    tpu.vector_store %arg8[%c0_27, %c0_28], %58 {strides = array<i32>} : memref<32x128xf32, #tpu.memory_space<vmem>>, vector<32x128xf32>,
    return
  }
  func.func @transform_0(%arg0: i32) -> (i32, i32) {
    %c0_i32 = arith.constant 0 : i32
    %c0_i32_0 = arith.constant 0 : i32
    return %arg0, %c0_i32 : i32, i32
  }
  func.func @transform_1(%arg0: i32) -> (i32, i32) {
    %c0_i32 = arith.constant 0 : i32
    %c0_i32_0 = arith.constant 0 : i32
    %c0_i32_1 = arith.constant 0 : i32
    return %c0_i32, %c0_i32_0 : i32, i32
  }
  func.func @transform_2(%arg0: i32) -> (i32, i32) {
    %c0_i32 = arith.constant 0 : i32
    %c0_i32_0 = arith.constant 0 : i32
    %c0_i32_1 = arith.constant 0 : i32
    return %c0_i32, %c0_i32_0 : i32, i32
  }
  func.func @transform_3(%arg0: i32) -> (i32, i32) {
    %c0_i32 = arith.constant 0 : i32
    %c0_i32_0 = arith.constant 0 : i32
    %c0_i32_1 = arith.constant 0 : i32
    return %c0_i32, %c0_i32_0 : i32, i32
  }
  func.func @transform_4(%arg0: i32) -> (i32, i32) {
    %c0_i32 = arith.constant 0 : i32
    %c0_i32_0 = arith.constant 0 : i32
    %c0_i32_1 = arith.constant 0 : i32
    return %c0_i32, %c0_i32_0 : i32, i32
  }
  func.func @transform_5(%arg0: i32) -> (i32, i32) {
    %c0_i32 = arith.constant 0 : i32
    %c0_i32_0 = arith.constant 0 : i32
    %c0_i32_1 = arith.constant 0 : i32
    return %c0_i32, %c0_i32_0 : i32, i32
  }
  func.func @transform_6(%arg0: i32) -> (i32, i32) {
    %c0_i32 = arith.constant 0 : i32
    %c0_i32_0 = arith.constant 0 : i32
    %c0_i32_1 = arith.constant 0 : i32
    return %c0_i32, %c0_i32_0 : i32, i32
  }
  func.func @transform_7(%arg0: i32) -> (i32, i32) {
    %c0_i32 = arith.constant 0 : i32
    %c0_i32_0 = arith.constant 0 : i32
    return %arg0, %c0_i32 : i32, i32
  }
}

</mosaic_0001>

<llo_original>
// kernel: tpu_custom_call.1
$region0: #{tpu_custom_call.1}
  #allocation0 [shape = 'u32[]', space=smem, size = 0x4, offset = 0x4, fixed_abs, tag = 'smem constant byte address 0x4 - core index']
  #allocation1 [shape = 'u32[144,128]{1,0:T(1,128)}', space=vmem, size = 0x12000, scoped, tag = 'internal scratch']
  %s0 = inlined_call_operand.hbm [shape: f32[8,128], index: 0, kind: input, shape index: {}]
  %s1 = inlined_call_operand.hbm [shape: f32[16,128], index: 1, kind: output, shape index: {}]
  %s2 = sld [smem:[#allocation0]]
  $region41: #{tpu_custom_call.1} parent=0
    _
  %s4 = ssub.s32 1, %s2
  %s5 = scalar_select 0, %s4, %s2
  $region1: #{tpu_custom_call.1} parent=0
    #allocation2 [shape = 'u8[4096]{0}', space=vmem, size = 0x1000, scoped, tag = 'input window, operand 0, single buffered']
    #allocation3 [shape = 's32[2]{0}', space=sflag, size = 0x8, scoped, tag = 'scoped memory for tpu_custom_call.1']
    #allocation4 [shape = 's32[2]{0}', space=sflag, size = 0x8, scoped, tag = 'scoped memory for tpu_custom_call.1']
    #allocation5 [shape = 'u8[8192]{0}', space=vmem, size = 0x2000, scoped, tag = 'output window, operand 0']
    %6 = vsyncpa [#allocation3], 0
    %7 = vsyncpa [#allocation4], 0
    %s8 = scalar_lea.sflag [#allocation4], 1
    %9 = vsyncpa %s8, 0
    loop: start=0, step=1, limit=4
    $region2: #{tpu_custom_call.1} parent=1 // loop_pre_header
      _
    $region3: #{tpu_custom_call.1} parent=1 // loop_header
      %s11 = sphi 0, %s15
      %p12 = scmp.ge.s32.totalorder %s11, 4
      %s19 = sphi 0, %s19
      %s21 = sphi 0, %s19
      %s22 = sphi 0, %s21
      %s36 = sphi 0, %s22
      %s42 = sphi 0, %s44
      %s45 = sphi 0, %s42
      %s46 = sphi 0, %s45
      %s62 = sphi 0, %s46
    $region4: #{tpu_custom_call.1} parent=1 // loop_header_branch
      %14 = sbr.rel (%p12) target = $region8
    $region5: #{tpu_custom_call.1} parent=1 // loop_body
      %s16 = ssub.s32 %s11, 1
      %s17 = ssub.s32 %s11, 2
      %s18 = sadd.s32 %s11, 1
      %s20 = sadd.s32 %s19, 1
      %p23 = scmp.eq.s32.totalorder %s11, 1
      %p24 = scmp.ne.s32.totalorder %s19, %s21
      %p25 = scmp.eq.s32.totalorder %s11, 0
      %p26 = por %p24, %p25
      %p27 = scmp.ne.s32.totalorder %s19, %s21
      %p28 = scmp.eq.s32.totalorder %s16, 1
      %p29 = por %p27, %p28
      %p30 = scmp.ne.s32.totalorder %s21, %s22
      %p31 = scmp.eq.s32.totalorder %s16, 0
      %p32 = por %p30, %p31
      %p33 = scmp.ne.s32.totalorder %s21, %s22
      %p34 = scmp.eq.s32.totalorder %s17, 1
      %p35 = por %p33, %p34
      %p37 = scmp.ne.s32.totalorder %s22, %s36
      %p38 = scmp.eq.s32.totalorder %s17, 0
      %p39 = por %p37, %p38
      %s40 = ssub.s32 %s11, %s18
      %p41 = scmp.eq.s32.totalorder %s40, 0
      %s43 = sadd.s32 %s42, 1
      %s44 = scalar_select %p41, %s42, %s43
      %p47 = pneg %p41
      %p48 = scmp.eq.s32.totalorder %s11, 1
      %p49 = por %p47, %p48
      %p50 = scmp.ne.s32.totalorder %s42, %s45
      %p51 = scmp.eq.s32.totalorder %s11, 0
      %p52 = por %p50, %p51
      %p53 = scmp.ne.s32.totalorder %s42, %s45
      %p54 = scmp.eq.s32.totalorder %s16, 1
      %p55 = por %p53, %p54
      %p56 = scmp.ne.s32.totalorder %s45, %s46
      %p57 = scmp.eq.s32.totalorder %s16, 0
      %p58 = por %p56, %p57
      %p59 = scmp.ne.s32.totalorder %s45, %s46
      %p60 = scmp.eq.s32.totalorder %s17, 1
      %p61 = por %p59, %p60
      %p63 = scmp.ne.s32.totalorder %s46, %s62
      %p64 = scmp.eq.s32.totalorder %s17, 0
      %p65 = por %p63, %p64
      %p66 = scmp.le.s32.totalorder 1, %s11
      %p67 = scmp.lt.s32.totalorder %s11, 3
      %p68 = pnand %p66, %p67
      %p69 = pneg %p68
      // Predicated region
      $region9: #{tpu_custom_call.1} parent=5 // pred_check
        _
      $region10: #{tpu_custom_call.1} parent=5 // pred_check_branch
        %71 = sbr.rel (%p68) target = $region12
      $region11: #{tpu_custom_call.1} parent=5 // pred_region
        %s72 = ssub.s32 %s11, 1
        // Predicated region
        $region13: #{tpu_custom_call.1} parent=11 // pred_check
          %p73 = pneg %p32
        $region14: #{tpu_custom_call.1} parent=11 // pred_check_branch
          %75 = sbr.rel (%p73) target = $region16
        $region15: #{tpu_custom_call.1} parent=11 // pred_region
          %s77 = ssub.s32 128, 128
          %78 = vsyncadd [#allocation3], %s77
          %s80 = sshll.u32 [#allocation2], 4
          %s81 = int_to_ptr.vmem [resolvable:$true] %s80
          %83 = dma.hbm_to_vmem [thread:$0]  %s0, 128, %s81, [#allocation3]
        $region16: #{tpu_custom_call.1} parent=11 // pred_fallthru
          _
      $region12: #{tpu_custom_call.1} parent=5 // pred_fallthru
        _
      %p84 = scmp.lt.s32.totalorder %s11, 2
      // Predicated region
      $region17: #{tpu_custom_call.1} parent=5 // pred_check
        %p85 = pneg %p84
      $region18: #{tpu_custom_call.1} parent=5 // pred_check_branch
        %87 = sbr.rel (%p85) target = $region20
      $region19: #{tpu_custom_call.1} parent=5 // pred_region
        _
      $region20: #{tpu_custom_call.1} parent=5 // pred_fallthru
        _
      %p88 = scmp.le.s32.totalorder 1, %s11
      %p89 = scmp.lt.s32.totalorder %s11, 3
      %p90 = pnand %p88, %p89
      %p91 = pneg %p90
      // Predicated region
      $region21: #{tpu_custom_call.1} parent=5 // pred_check
        _
      $region22: #{tpu_custom_call.1} parent=5 // pred_check_branch
        %93 = sbr.rel (%p90) target = $region24
      $region23: #{tpu_custom_call.1} parent=5 // pred_region
        %s94 = ssub.s32 %s11, 1
        // Predicated region
        $region25: #{tpu_custom_call.1} parent=23 // pred_check
          %p95 = pneg %p32
        $region26: #{tpu_custom_call.1} parent=23 // pred_check_branch
          %97 = sbr.rel (%p95) target = $region28
        $region27: #{tpu_custom_call.1} parent=23 // pred_region
          %98 = dma.done [#allocation3], 128
        $region28: #{tpu_custom_call.1} parent=23 // pred_fallthru
          _
        %p99 = pneg %p32
        %p100 = pneg %p29
        %p101 = pneg %p58
        %p102 = pneg %p55
        %s103 = sand.u32 %s45, 1
        %s104 = scalar_lea.sflag [#allocation4], %s103
        %s105 = sand.u32 %s45, 1
        %s106 = smul.addr %s105, 8
        %s107 = scalar_lea.vmem [#allocation5], %s106
        %v108 = vld [vmem:[#allocation2] sm:$0xff]
        %v109 = vadd.f32 %v108, 1.0
        %110 = vst [vmem:[%s107] sm:$0xff] %v109
        %s111 = sand.u32 %s45, 1
        %s112 = scalar_lea.sflag [#allocation4], %s111
        %s113 = sand.u32 %s45, 1
        %s114 = smul.addr %s113, 8
        %s115 = scalar_lea.vmem [#allocation5], %s114
        // Predicated region
        $region29: #{tpu_custom_call.1} parent=23 // pred_check
          %p116 = pneg %p55
        $region30: #{tpu_custom_call.1} parent=23 // pred_check_branch
          %118 = sbr.rel (%p116) target = $region32
        $region31: #{tpu_custom_call.1} parent=23 // pred_region
          %s120 = ssub.s32 128, 128
          %121 = vsyncadd %s112, %s120
          %s122 = smul.addr %s16, 128
          %s123 = scalar_lea.hbm %s1, %s122
          %s125 = sshll.u32 %s115, 4
          %s126 = int_to_ptr.vmem [resolvable:$true] %s125
          %128 = dma.vmem_to_hbm [thread:$0]  %s126, 128, %s123, %s112
        $region32: #{tpu_custom_call.1} parent=23 // pred_fallthru
          _
      $region24: #{tpu_custom_call.1} parent=5 // pred_fallthru
        _
      %p129 = scmp.le.s32.totalorder 2, %s11
      // Predicated region
      $region33: #{tpu_custom_call.1} parent=5 // pred_check
        %p130 = pneg %p129
      $region34: #{tpu_custom_call.1} parent=5 // pred_check_branch
        %132 = sbr.rel (%p130) target = $region36
      $region35: #{tpu_custom_call.1} parent=5 // pred_region
        %s133 = ssub.s32 %s11, 2
        // Predicated region
        $region37: #{tpu_custom_call.1} parent=35 // pred_check
          %p134 = pneg %p61
        $region38: #{tpu_custom_call.1} parent=35 // pred_check_branch
          %136 = sbr.rel (%p134) target = $region40
        $region39: #{tpu_custom_call.1} parent=35 // pred_region
          %s137 = sand.u32 %s46, 1
          %s138 = scalar_lea.sflag [#allocation4], %s137
          %s139 = sand.u32 %s46, 1
          %s140 = smul.addr %s139, 8
          %s141 = scalar_lea.vmem [#allocation5], %s140
          %142 = dma.done %s138, 128
        $region40: #{tpu_custom_call.1} parent=35 // pred_fallthru
          _
      $region36: #{tpu_custom_call.1} parent=5 // pred_fallthru
        _
    $region6: #{tpu_custom_call.1} parent=1 // loop_footer
      %s15 = sadd.s32 1, %s11
    $region7: #{tpu_custom_call.1} parent=1 // loop_footer_branch
      %10 = sbr.rel target = $region3
    $region8: #{tpu_custom_call.1} parent=1 // loop_exit
      _
    %143 = vsyncpa [#allocation3], 1
    %s144 = scalar_lea.sflag [#allocation3], 1
    %145 = vsyncpa %s144, 1
    %146 = vsyncpa [#allocation4], 1
    %s147 = scalar_lea.sflag [#allocation4], 1
    %148 = vsyncpa %s147, 1

// kernel: _apply.1
$region0: #{_apply.1}
  #allocation0 [shape = 'u32[]', space=smem, size = 0x4, offset = 0x4, fixed_abs, tag = 'smem constant byte address 0x4 - core index']
  #allocation1 [shape = 'u32[144,128]{1,0:T(1,128)}', space=vmem, size = 0x12000, scoped, tag = 'internal scratch']
  %s0 = inlined_call_operand.vmem [shape: bf16[32,128], index: 0, kind: input, shape index: {}]
  %s1 = inlined_call_operand.hbm [shape: bf16[128,128], index: 1, kind: input, shape index: {}]
  %s2 = inlined_call_operand.vmem [shape: f32[1,128], index: 2, kind: input, shape index: {}]
  %s3 = inlined_call_operand.hbm [shape: bf16[128,128], index: 3, kind: input, shape index: {}]
  %s4 = inlined_call_operand.vmem [shape: f32[1,128], index: 4, kind: input, shape index: {}]
  %s5 = inlined_call_operand.hbm [shape: bf16[128,128], index: 5, kind: input, shape index: {}]
  %s6 = inlined_call_operand.vmem [shape: f32[1,128], index: 6, kind: input, shape index: {}]
  %s7 = inlined_call_operand.vmem [shape: f32[32,128], index: 7, kind: output, shape index: {}]
  %s8 = sld [smem:[#allocation0]]
  $region50: #{_apply.1} parent=0
    _
  %s10 = ssub.s32 1, %s8
  %s11 = scalar_select 0, %s10, %s8
  $region1: #{_apply.1} parent=0
    #allocation2 [shape = 'u8[32768]{0}', space=vmem, size = 0x8000, scoped, tag = 'input window, operand 1, single buffered']
    #allocation3 [shape = 's32[1]{0}', space=sflag, size = 0x4, scoped, tag = 'scoped memory for _apply.1']
    #allocation4 [shape = 'u8[32768]{0}', space=vmem, size = 0x8000, scoped, tag = 'input window, operand 3, single buffered']
    #allocation5 [shape = 's32[1]{0}', space=sflag, size = 0x4, scoped, tag = 'scoped memory for _apply.1']
    #allocation6 [shape = 'u8[32768]{0}', space=vmem, size = 0x8000, scoped, tag = 'input window, operand 5, single buffered']
    %12 = vsyncpa [#allocation3], 0
    %13 = vsyncpa [#allocation5], 0
    // Predicated region
    $region2: #{_apply.1} parent=1 // pred_check
      _
    $region3: #{_apply.1} parent=1 // pred_check_branch
      %15 = sbr.rel (0) target = $region5
    $region4: #{_apply.1} parent=1 // pred_region
      _
    $region5: #{_apply.1} parent=1 // pred_fallthru
      _
    // Predicated region
    $region6: #{_apply.1} parent=1 // pred_check
      _
    $region7: #{_apply.1} parent=1 // pred_check_branch
      %17 = sbr.rel (0) target = $region9
    $region8: #{_apply.1} parent=1 // pred_region
      %s19 = ssub.s32 1024, 1024
      %20 = vsyncadd [#allocation3], %s19
      %s21 = sshll.u32 [#allocation2], 4
      %s22 = int_to_ptr.vmem [resolvable:$true] %s21
      %27 = dma.hbm_to_vmem [thread:$0]  %s1, 1024, %s22, [#allocation3], 64, 64, 4
    $region9: #{_apply.1} parent=1 // pred_fallthru
      _
    // Predicated region
    $region10: #{_apply.1} parent=1 // pred_check
      _
    $region11: #{_apply.1} parent=1 // pred_check_branch
      %29 = sbr.rel (0) target = $region13
    $region12: #{_apply.1} parent=1 // pred_region
      _
    $region13: #{_apply.1} parent=1 // pred_fallthru
      _
    // Predicated region
    $region14: #{_apply.1} parent=1 // pred_check
      _
    $region15: #{_apply.1} parent=1 // pred_check_branch
      %31 = sbr.rel (0) target = $region17
    $region16: #{_apply.1} parent=1 // pred_region
      %s33 = ssub.s32 1024, 1024
      %34 = vsyncadd [#allocation5], %s33
      %s35 = sshll.u32 [#allocation4], 4
      %s36 = int_to_ptr.vmem [resolvable:$true] %s35
      %41 = dma.hbm_to_vmem [thread:$0]  %s3, 1024, %s36, [#allocation5], 64, 64, 4
    $region17: #{_apply.1} parent=1 // pred_fallthru
      _
    // Predicated region
    $region18: #{_apply.1} parent=1 // pred_check
      _
    $region19: #{_apply.1} parent=1 // pred_check_branch
      %43 = sbr.rel (0) target = $region21
    $region20: #{_apply.1} parent=1 // pred_region
      _
    $region21: #{_apply.1} parent=1 // pred_fallthru
      _
    // Predicated region
    $region22: #{_apply.1} parent=1 // pred_check
      _
    $region23: #{_apply.1} parent=1 // pred_check_branch
      %45 = sbr.rel (0) target = $region25
    $region24: #{_apply.1} parent=1 // pred_region
      %s47 = ssub.s32 1024, 1024
      %48 = vsyncadd [#allocation5], %s47
      %s49 = sshll.u32 [#allocation6], 4
      %s50 = int_to_ptr.vmem [resolvable:$true] %s49
      %55 = dma.hbm_to_vmem [thread:$0]  %s5, 1024, %s50, [#allocation5], 64, 64, 4
    $region25: #{_apply.1} parent=1 // pred_fallthru
      _
    // Predicated region
    $region26: #{_apply.1} parent=1 // pred_check
      _
    $region27: #{_apply.1} parent=1 // pred_check_branch
      %57 = sbr.rel (0) target = $region29
    $region28: #{_apply.1} parent=1 // pred_region
      _
    $region29: #{_apply.1} parent=1 // pred_fallthru
      _
    // Predicated region
    $region30: #{_apply.1} parent=1 // pred_check
      _
    $region31: #{_apply.1} parent=1 // pred_check_branch
      %59 = sbr.rel (0) target = $region33
    $region32: #{_apply.1} parent=1 // pred_region
      %60 = dma.done [#allocation3], 1024
    $region33: #{_apply.1} parent=1 // pred_fallthru
      _
    // Predicated region
    $region34: #{_apply.1} parent=1 // pred_check
      _
    $region35: #{_apply.1} parent=1 // pred_check_branch
      %62 = sbr.rel (0) target = $region37
    $region36: #{_apply.1} parent=1 // pred_region
      %63 = dma.done [#allocation5], 1024
    $region37: #{_apply.1} parent=1 // pred_fallthru
      _
    // Predicated region
    $region38: #{_apply.1} parent=1 // pred_check
      _
    $region39: #{_apply.1} parent=1 // pred_check_branch
      %65 = sbr.rel (0) target = $region41
    $region40: #{_apply.1} parent=1 // pred_region
      %66 = dma.done [#allocation5], 1024
    $region41: #{_apply.1} parent=1 // pred_fallthru
      _
    %v68 = vld [vmem:[%s0] sm:$0xf]
    %v69 = vld [vmem:[%s0 + $0x4] sm:$0xf]
    %v70 = vld [vmem:[%s0 + $0x8] sm:$0xf]
    %v71 = vld [vmem:[%s0 + $0xc] sm:$0xf]
    %v72 = vld [vmem:[#allocation2] sm:$0xf]
    %v73 = vld [vmem:[#allocation2 + $0x4] sm:$0xf]
    %v74 = vld [vmem:[#allocation2 + $0x8] sm:$0xf]
    %v75 = vld [vmem:[#allocation2 + $0xc] sm:$0xf]
    %v76 = vld [vmem:[#allocation2 + $0x10] sm:$0xf]
    %v77 = vld [vmem:[#allocation2 + $0x14] sm:$0xf]
    %v78 = vld [vmem:[#allocation2 + $0x18] sm:$0xf]
    %v79 = vld [vmem:[#allocation2 + $0x1c] sm:$0xf]
    %v80 = vld [vmem:[#allocation2 + $0x20] sm:$0xf]
    %v81 = vld [vmem:[#allocation2 + $0x24] sm:$0xf]
    %v82 = vld [vmem:[#allocation2 + $0x28] sm:$0xf]
    %v83 = vld [vmem:[#allocation2 + $0x2c] sm:$0xf]
    %v84 = vld [vmem:[#allocation2 + $0x30] sm:$0xf]
    %v85 = vld [vmem:[#allocation2 + $0x34] sm:$0xf]
    %v86 = vld [vmem:[#allocation2 + $0x38] sm:$0xf]
    %v87 = vld [vmem:[#allocation2 + $0x3c] sm:$0xf]
    %v88 = vld [vmem:[%s2] sm:$0x1]
    %v90 = vlaneseq
    %v91 = vshrl.u32 %v90, 7
    %v92 = vsub.s32 0, %v91
    %v93 = vrot.slane %v88, %v92
    %v99 = vunpack.c.l.b16 %v68
    %v100 = vunpack.c.l.b16 %v69
    %v101 = vunpack.c.l.b16 %v70
    %v102 = vunpack.c.l.b16 %v71
    %v103 = vpack.c.b16 %v100, %v99
    %v104 = vpack.c.b16 %v102, %v101
    %v123 = vunpack.c.l.b16 %v72
    %v124 = vunpack.c.l.b16 %v73
    %v125 = vunpack.c.l.b16 %v74
    %v126 = vunpack.c.l.b16 %v75
    %v127 = vunpack.c.l.b16 %v76
    %v128 = vunpack.c.l.b16 %v77
    %v129 = vunpack.c.l.b16 %v78
    %v130 = vunpack.c.l.b16 %v79
    %v131 = vunpack.c.l.b16 %v80
    %v132 = vunpack.c.l.b16 %v81
    %v133 = vunpack.c.l.b16 %v82
    %v134 = vunpack.c.l.b16 %v83
    %v135 = vunpack.c.l.b16 %v84
    %v136 = vunpack.c.l.b16 %v85
    %v137 = vunpack.c.l.b16 %v86
    %v138 = vunpack.c.l.b16 %v87
    %v139 = vpack.c.b16 %v124, %v123
    %v140 = vpack.c.b16 %v126, %v125
    %v141 = vpack.c.b16 %v128, %v127
    %v142 = vpack.c.b16 %v130, %v129
    %v143 = vpack.c.b16 %v132, %v131
    %v144 = vpack.c.b16 %v134, %v133
    %v145 = vpack.c.b16 %v136, %v135
    %v146 = vpack.c.b16 %v138, %v137
    %155 = vmatprep.subr.bf16.mxu0 0
    %156 = vmatpush1.bf16.msra.mxu0 %v146
    %157 = vmatprep.subr.bf16.mxu0 0
    %158 = vmatpush1.bf16.msra.mxu0 %v145
    %159 = vmatprep.subr.bf16.mxu0 0
    %160 = vmatpush1.bf16.msra.mxu0 %v144
    %161 = vmatprep.subr.bf16.mxu0 0
    %162 = vmatpush1.bf16.msra.mxu0 %v143
    %163 = vmatprep.subr.bf16.mxu0 0
    %164 = vmatpush1.bf16.msra.mxu0 %v142
    %165 = vmatprep.subr.bf16.mxu0 0
    %166 = vmatpush1.bf16.msra.mxu0 %v141
    %167 = vmatprep.subr.bf16.mxu0 0
    %168 = vmatpush1.bf16.msra.mxu0 %v140
    %169 = vmatprep.subr.bf16.mxu0 0
    %170 = vmatpush1.bf16.msra.mxu0 %v139
    %171 = vmatprep.subr.bf16.mxu0 0
    %172 = vmatpush2.bf16.msra.mxu0 0
    %173 = vmatprep.subr.bf16.mxu0 0
    %174 = vmatpush2.bf16.msra.mxu0 0
    %175 = vmatprep.subr.bf16.mxu0 0
    %176 = vmatpush2.bf16.msra.mxu0 0
    %177 = vmatprep.subr.bf16.mxu0 0
    %178 = vmatpush2.bf16.msra.mxu0 0
    %179 = vmatprep.subr.bf16.mxu0 0
    %180 = vmatpush2.bf16.msra.mxu0 0
    %181 = vmatprep.subr.bf16.mxu0 0
    %182 = vmatpush2.bf16.msra.mxu0 0
    %183 = vmatprep.subr.bf16.mxu0 0
    %184 = vmatpush2.bf16.msra.mxu0 0
    %185 = vmatprep.subr.bf16.mxu0 0
    %186 = vmatpush2.bf16.msra.mxu0 0
    %187 = vmatprep.mubr.bf16.mxu0 0
    %188 = vmatmul.mubr.bf16.gmra.mxu0 %v103
    %v189 = vpop.f32.mrf.mxu0
    %v190 = vadd.f32 %v93, %v189
    %v191 = vpop.f32.mrf.mxu0
    %v192 = vpop.f32.mrf.mxu0
    %v193 = vadd.f32 %v93, %v192
    %v194 = vpop.f32.mrf.mxu0
    %195 = vmatprep.mubr.bf16.mxu0 0
    %196 = vmatmul.mubr.bf16.gmra.mxu0 %v104
    %v197 = vpop.f32.mrf.mxu0
    %v198 = vadd.f32 %v93, %v197
    %v199 = vpop.f32.mrf.mxu0
    %v200 = vpop.f32.mrf.mxu0
    %v201 = vadd.f32 %v93, %v200
    %v202 = vpop.f32.mrf.mxu0
    %203 = vdwg.mxu0
    %v204 = vmax.f32 %v190, 0.0
    %v205 = vmax.f32 %v193, 0.0
    %v206 = vmax.f32 %v198, 0.0
    %v207 = vmax.f32 %v201, 0.0
    %v208 = vpack.c.bf16 %v205, %v204
    %v209 = vpack.c.bf16 %v207, %v206
    %v210 = vld [vmem:[#allocation4] sm:$0xf]
    %v211 = vld [vmem:[#allocation4 + $0x4] sm:$0xf]
    %v212 = vld [vmem:[#allocation4 + $0x8] sm:$0xf]
    %v213 = vld [vmem:[#allocation4 + $0xc] sm:$0xf]
    %v214 = vld [vmem:[#allocation4 + $0x10] sm:$0xf]
    %v215 = vld [vmem:[#allocation4 + $0x14] sm:$0xf]
    %v216 = vld [vmem:[#allocation4 + $0x18] sm:$0xf]
    %v217 = vld [vmem:[#allocation4 + $0x1c] sm:$0xf]
    %v218 = vld [vmem:[#allocation4 + $0x20] sm:$0xf]
    %v219 = vld [vmem:[#allocation4 + $0x24] sm:$0xf]
    %v220 = vld [vmem:[#allocation4 + $0x28] sm:$0xf]
    %v221 = vld [vmem:[#allocation4 + $0x2c] sm:$0xf]
    %v222 = vld [vmem:[#allocation4 + $0x30] sm:$0xf]
    %v223 = vld [vmem:[#allocation4 + $0x34] sm:$0xf]
    %v224 = vld [vmem:[#allocation4 + $0x38] sm:$0xf]
    %v225 = vld [vmem:[#allocation4 + $0x3c] sm:$0xf]
    %v226 = vld [vmem:[%s4] sm:$0x1]
    %v228 = vlaneseq
    %v229 = vshrl.u32 %v228, 7
    %v230 = vsub.s32 0, %v229
    %v231 = vrot.slane %v226, %v230
    %v249 = vunpack.c.l.b16 %v210
    %v250 = vunpack.c.l.b16 %v211
    %v251 = vunpack.c.l.b16 %v212
    %v252 = vunpack.c.l.b16 %v213
    %v253 = vunpack.c.l.b16 %v214
    %v254 = vunpack.c.l.b16 %v215
    %v255 = vunpack.c.l.b16 %v216
    %v256 = vunpack.c.l.b16 %v217
    %v257 = vunpack.c.l.b16 %v218
    %v258 = vunpack.c.l.b16 %v219
    %v259 = vunpack.c.l.b16 %v220
    %v260 = vunpack.c.l.b16 %v221
    %v261 = vunpack.c.l.b16 %v222
    %v262 = vunpack.c.l.b16 %v223
    %v263 = vunpack.c.l.b16 %v224
    %v264 = vunpack.c.l.b16 %v225
    %v265 = vpack.c.b16 %v250, %v249
    %v266 = vpack.c.b16 %v252, %v251
    %v267 = vpack.c.b16 %v254, %v253
    %v268 = vpack.c.b16 %v256, %v255
    %v269 = vpack.c.b16 %v258, %v257
    %v270 = vpack.c.b16 %v260, %v259
    %v271 = vpack.c.b16 %v262, %v261
    %v272 = vpack.c.b16 %v264, %v263
    %281 = vmatprep.subr.bf16.mxu0 0
    %282 = vmatpush1.bf16.msra.mxu0 %v272
    %283 = vmatprep.subr.bf16.mxu0 0
    %284 = vmatpush1.bf16.msra.mxu0 %v271
    %285 = vmatprep.subr.bf16.mxu0 0
    %286 = vmatpush1.bf16.msra.mxu0 %v270
    %287 = vmatprep.subr.bf16.mxu0 0
    %288 = vmatpush1.bf16.msra.mxu0 %v269
    %289 = vmatprep.subr.bf16.mxu0 0
    %290 = vmatpush1.bf16.msra.mxu0 %v268
    %291 = vmatprep.subr.bf16.mxu0 0
    %292 = vmatpush1.bf16.msra.mxu0 %v267
    %293 = vmatprep.subr.bf16.mxu0 0
    %294 = vmatpush1.bf16.msra.mxu0 %v266
    %295 = vmatprep.subr.bf16.mxu0 0
    %296 = vmatpush1.bf16.msra.mxu0 %v265
    %297 = vmatprep.subr.bf16.mxu0 0
    %298 = vmatpush2.bf16.msra.mxu0 0
    %299 = vmatprep.subr.bf16.mxu0 0
    %300 = vmatpush2.bf16.msra.mxu0 0
    %301 = vmatprep.subr.bf16.mxu0 0
    %302 = vmatpush2.bf16.msra.mxu0 0
    %303 = vmatprep.subr.bf16.mxu0 0
    %304 = vmatpush2.bf16.msra.mxu0 0
    %305 = vmatprep.subr.bf16.mxu0 0
    %306 = vmatpush2.bf16.msra.mxu0 0
    %307 = vmatprep.subr.bf16.mxu0 0
    %308 = vmatpush2.bf16.msra.mxu0 0
    %309 = vmatprep.subr.bf16.mxu0 0
    %310 = vmatpush2.bf16.msra.mxu0 0
    %311 = vmatprep.subr.bf16.mxu0 0
    %312 = vmatpush2.bf16.msra.mxu0 0
    %313 = vmatprep.mubr.bf16.mxu0 0
    %314 = vmatmul.mubr.bf16.gmra.mxu0 %v208
    %v315 = vpop.f32.mrf.mxu0
    %v316 = vadd.f32 %v231, %v315
    %v317 = vpop.f32.mrf.mxu0
    %v318 = vpop.f32.mrf.mxu0
    %v319 = vadd.f32 %v231, %v318
    %v320 = vpop.f32.mrf.mxu0
    %321 = vmatprep.mubr.bf16.mxu0 0
    %322 = vmatmul.mubr.bf16.gmra.mxu0 %v209
    %v323 = vpop.f32.mrf.mxu0
    %v324 = vadd.f32 %v231, %v323
    %v325 = vpop.f32.mrf.mxu0
    %v326 = vpop.f32.mrf.mxu0
    %v327 = vadd.f32 %v231, %v326
    %v328 = vpop.f32.mrf.mxu0
    %329 = vdwg.mxu0
    %v330 = vmax.f32 %v316, 0.0
    %v331 = vmax.f32 %v319, 0.0
    %v332 = vmax.f32 %v324, 0.0
    %v333 = vmax.f32 %v327, 0.0
    %v334 = vpack.c.bf16 %v331, %v330
    %v335 = vpack.c.bf16 %v333, %v332
    %v336 = vld [vmem:[#allocation6] sm:$0xf]
    %v337 = vld [vmem:[#allocation6 + $0x4] sm:$0xf]
    %v338 = vld [vmem:[#allocation6 + $0x8] sm:$0xf]
    %v339 = vld [vmem:[#allocation6 + $0xc] sm:$0xf]
    %v340 = vld [vmem:[#allocation6 + $0x10] sm:$0xf]
    %v341 = vld [vmem:[#allocation6 + $0x14] sm:$0xf]
    %v342 = vld [vmem:[#allocation6 + $0x18] sm:$0xf]
    %v343 = vld [vmem:[#allocation6 + $0x1c] sm:$0xf]
    %v344 = vld [vmem:[#allocation6 + $0x20] sm:$0xf]
    %v345 = vld [vmem:[#allocation6 + $0x24] sm:$0xf]
    %v346 = vld [vmem:[#allocation6 + $0x28] sm:$0xf]
    %v347 = vld [vmem:[#allocation6 + $0x2c] sm:$0xf]
    %v348 = vld [vmem:[#allocation6 + $0x30] sm:$0xf]
    %v349 = vld [vmem:[#allocation6 + $0x34] sm:$0xf]
    %v350 = vld [vmem:[#allocation6 + $0x38] sm:$0xf]
    %v351 = vld [vmem:[#allocation6 + $0x3c] sm:$0xf]
    %v352 = vld [vmem:[%s6] sm:$0x1]
    %v354 = vlaneseq
    %v355 = vshrl.u32 %v354, 7
    %v356 = vsub.s32 0, %v355
    %v357 = vrot.slane %v352, %v356
    %v375 = vunpack.c.l.b16 %v336
    %v376 = vunpack.c.l.b16 %v337
    %v377 = vunpack.c.l.b16 %v338
    %v378 = vunpack.c.l.b16 %v339
    %v379 = vunpack.c.l.b16 %v340
    %v380 = vunpack.c.l.b16 %v341
    %v381 = vunpack.c.l.b16 %v342
    %v382 = vunpack.c.l.b16 %v343
    %v383 = vunpack.c.l.b16 %v344
    %v384 = vunpack.c.l.b16 %v345
    %v385 = vunpack.c.l.b16 %v346
    %v386 = vunpack.c.l.b16 %v347
    %v387 = vunpack.c.l.b16 %v348
    %v388 = vunpack.c.l.b16 %v349
    %v389 = vunpack.c.l.b16 %v350
    %v390 = vunpack.c.l.b16 %v351
    %v391 = vpack.c.b16 %v376, %v375
    %v392 = vpack.c.b16 %v378, %v377
    %v393 = vpack.c.b16 %v380, %v379
    %v394 = vpack.c.b16 %v382, %v381
    %v395 = vpack.c.b16 %v384, %v383
    %v396 = vpack.c.b16 %v386, %v385
    %v397 = vpack.c.b16 %v388, %v387
    %v398 = vpack.c.b16 %v390, %v389
    %407 = vmatprep.subr.bf16.mxu0 0
    %408 = vmatpush1.bf16.msra.mxu0 %v398
    %409 = vmatprep.subr.bf16.mxu0 0
    %410 = vmatpush1.bf16.msra.mxu0 %v397
    %411 = vmatprep.subr.bf16.mxu0 0
    %412 = vmatpush1.bf16.msra.mxu0 %v396
    %413 = vmatprep.subr.bf16.mxu0 0
    %414 = vmatpush1.bf16.msra.mxu0 %v395
    %415 = vmatprep.subr.bf16.mxu0 0
    %416 = vmatpush1.bf16.msra.mxu0 %v394
    %417 = vmatprep.subr.bf16.mxu0 0
    %418 = vmatpush1.bf16.msra.mxu0 %v393
    %419 = vmatprep.subr.bf16.mxu0 0
    %420 = vmatpush1.bf16.msra.mxu0 %v392
    %421 = vmatprep.subr.bf16.mxu0 0
    %422 = vmatpush1.bf16.msra.mxu0 %v391
    %423 = vmatprep.subr.bf16.mxu0 0
    %424 = vmatpush2.bf16.msra.mxu0 0
    %425 = vmatprep.subr.bf16.mxu0 0
    %426 = vmatpush2.bf16.msra.mxu0 0
    %427 = vmatprep.subr.bf16.mxu0 0
    %428 = vmatpush2.bf16.msra.mxu0 0
    %429 = vmatprep.subr.bf16.mxu0 0
    %430 = vmatpush2.bf16.msra.mxu0 0
    %431 = vmatprep.subr.bf16.mxu0 0
    %432 = vmatpush2.bf16.msra.mxu0 0
    %433 = vmatprep.subr.bf16.mxu0 0
    %434 = vmatpush2.bf16.msra.mxu0 0
    %435 = vmatprep.subr.bf16.mxu0 0
    %436 = vmatpush2.bf16.msra.mxu0 0
    %437 = vmatprep.subr.bf16.mxu0 0
    %438 = vmatpush2.bf16.msra.mxu0 0
    %439 = vmatprep.mubr.bf16.mxu0 0
    %440 = vmatmul.mubr.bf16.gmra.mxu0 %v334
    %v441 = vpop.f32.mrf.mxu0
    %v442 = vadd.f32 %v357, %v441
    %v443 = vpop.f32.mrf.mxu0
    %v444 = vpop.f32.mrf.mxu0
    %v445 = vadd.f32 %v357, %v444
    %v446 = vpop.f32.mrf.mxu0
    %447 = vmatprep.mubr.bf16.mxu0 0
    %448 = vmatmul.mubr.bf16.gmra.mxu0 %v335
    %v449 = vpop.f32.mrf.mxu0
    %v450 = vadd.f32 %v357, %v449
    %v451 = vpop.f32.mrf.mxu0
    %v452 = vpop.f32.mrf.mxu0
    %v453 = vadd.f32 %v357, %v452
    %v454 = vpop.f32.mrf.mxu0
    %455 = vdwg.mxu0
    %v456 = vlaneseq
    %v457 = vand.u32 %v456, 127
    %v458 = vand.u32 %v457, 7
    %vm459 = vcmp.lt.s32.totalorder %v458, 7
    %vm460 = vcmp.lt.s32.totalorder %v458, 6
    %vm461 = vcmp.lt.s32.totalorder %v458, 4
    %462 = vrot.lane.b32.xlu0 %v442, 127
    %v463 = vpop.permute.xlu0 %462
    %464 = vrot.lane.b32.xlu0 %v445, 127
    %v465 = vpop.permute.xlu0 %464
    %466 = vrot.lane.b32.xlu0 %v450, 127
    %v467 = vpop.permute.xlu0 %466
    %468 = vrot.lane.b32.xlu0 %v453, 127
    %v469 = vpop.permute.xlu0 %468
    %470 = vrot.lane.b32.xlu0 %v442, 7
    %v471 = vpop.permute.xlu0 %470
    %472 = vrot.lane.b32.xlu0 %v445, 7
    %v473 = vpop.permute.xlu0 %472
    %474 = vrot.lane.b32.xlu0 %v450, 7
    %v475 = vpop.permute.xlu0 %474
    %476 = vrot.lane.b32.xlu0 %v453, 7
    %v477 = vpop.permute.xlu0 %476
    %v478 = vsel %vm459, %v463, %v471
    %v479 = vsel %vm459, %v465, %v473
    %v480 = vsel %vm459, %v467, %v475
    %v481 = vsel %vm459, %v469, %v477
    %v482 = vmax.f32 %v442, %v478
    %v483 = vmax.f32 %v445, %v479
    %v484 = vmax.f32 %v450, %v480
    %v485 = vmax.f32 %v453, %v481
    %486 = vrot.lane.b32.xlu0 %v482, 126
    %v487 = vpop.permute.xlu0 %486
    %488 = vrot.lane.b32.xlu0 %v483, 126
    %v489 = vpop.permute.xlu0 %488
    %490 = vrot.lane.b32.xlu0 %v484, 126
    %v491 = vpop.permute.xlu0 %490
    %492 = vrot.lane.b32.xlu0 %v485, 126
    %v493 = vpop.permute.xlu0 %492
    %494 = vrot.lane.b32.xlu0 %v482, 6
    %v495 = vpop.permute.xlu0 %494
    %496 = vrot.lane.b32.xlu0 %v483, 6
    %v497 = vpop.permute.xlu0 %496
    %498 = vrot.lane.b32.xlu0 %v484, 6
    %v499 = vpop.permute.xlu0 %498
    %500 = vrot.lane.b32.xlu0 %v485, 6
    %v501 = vpop.permute.xlu0 %500
    %v502 = vsel %vm460, %v487, %v495
    %v503 = vsel %vm460, %v489, %v497
    %v504 = vsel %vm460, %v491, %v499
    %v505 = vsel %vm460, %v493, %v501
    %v506 = vmax.f32 %v482, %v502
    %v507 = vmax.f32 %v483, %v503
    %v508 = vmax.f32 %v484, %v504
    %v509 = vmax.f32 %v485, %v505
    %510 = vrot.lane.b32.xlu0 %v506, 124
    %v511 = vpop.permute.xlu0 %510
    %512 = vrot.lane.b32.xlu0 %v507, 124
    %v513 = vpop.permute.xlu0 %512
    %514 = vrot.lane.b32.xlu0 %v508, 124
    %v515 = vpop.permute.xlu0 %514
    %516 = vrot.lane.b32.xlu0 %v509, 124
    %v517 = vpop.permute.xlu0 %516
    %518 = vrot.lane.b32.xlu0 %v506, 4
    %v519 = vpop.permute.xlu0 %518
    %520 = vrot.lane.b32.xlu0 %v507, 4
    %v521 = vpop.permute.xlu0 %520
    %522 = vrot.lane.b32.xlu0 %v508, 4
    %v523 = vpop.permute.xlu0 %522
    %524 = vrot.lane.b32.xlu0 %v509, 4
    %v525 = vpop.permute.xlu0 %524
    %v526 = vsel %vm461, %v511, %v519
    %v527 = vsel %vm461, %v513, %v521
    %v528 = vsel %vm461, %v515, %v523
    %v529 = vsel %vm461, %v517, %v525
    %v530 = vmax.f32 %v506, %v526
    %v531 = vmax.f32 %v507, %v527
    %v532 = vmax.f32 %v508, %v528
    %v533 = vmax.f32 %v509, %v529
    %v534 = vsub.f32 %v442, %v530
    %v535 = vsub.f32 %v445, %v531
    %v536 = vsub.f32 %v450, %v532
    %v537 = vsub.f32 %v453, %v533
    %v538 = vmul.f32 %v534, 1.442695
    %v539 = vpow.pop %v538
    %v540 = vmul.f32 %v535, 1.442695
    %v541 = vpow.pop %v540
    %v542 = vmul.f32 %v536, 1.442695
    %v543 = vpow.pop %v542
    %v544 = vmul.f32 %v537, 1.442695
    %v545 = vpow.pop %v544
    %546 = vrot.lane.b32.xlu0 %v539, 127
    %v547 = vpop.permute.xlu0 %546
    %548 = vrot.lane.b32.xlu0 %v541, 127
    %v549 = vpop.permute.xlu0 %548
    %550 = vrot.lane.b32.xlu0 %v543, 127
    %v551 = vpop.permute.xlu0 %550
    %552 = vrot.lane.b32.xlu0 %v545, 127
    %v553 = vpop.permute.xlu0 %552
    %554 = vrot.lane.b32.xlu0 %v539, 7
    %v555 = vpop.permute.xlu0 %554
    %556 = vrot.lane.b32.xlu0 %v541, 7
    %v557 = vpop.permute.xlu0 %556
    %558 = vrot.lane.b32.xlu0 %v543, 7
    %v559 = vpop.permute.xlu0 %558
    %560 = vrot.lane.b32.xlu0 %v545, 7
    %v561 = vpop.permute.xlu0 %560
    %v562 = vsel %vm459, %v547, %v555
    %v563 = vsel %vm459, %v549, %v557
    %v564 = vsel %vm459, %v551, %v559
    %v565 = vsel %vm459, %v553, %v561
    %v566 = vadd.f32 %v539, %v562
    %v567 = vadd.f32 %v541, %v563
    %v568 = vadd.f32 %v543, %v564
    %v569 = vadd.f32 %v545, %v565
    %570 = vrot.lane.b32.xlu0 %v566, 126
    %v571 = vpop.permute.xlu0 %570
    %572 = vrot.lane.b32.xlu0 %v567, 126
    %v573 = vpop.permute.xlu0 %572
    %574 = vrot.lane.b32.xlu0 %v568, 126
    %v575 = vpop.permute.xlu0 %574
    %576 = vrot.lane.b32.xlu0 %v569, 126
    %v577 = vpop.permute.xlu0 %576
    %578 = vrot.lane.b32.xlu0 %v566, 6
    %v579 = vpop.permute.xlu0 %578
    %580 = vrot.lane.b32.xlu0 %v567, 6
    %v581 = vpop.permute.xlu0 %580
    %582 = vrot.lane.b32.xlu0 %v568, 6
    %v583 = vpop.permute.xlu0 %582
    %584 = vrot.lane.b32.xlu0 %v569, 6
    %v585 = vpop.permute.xlu0 %584
    %v586 = vsel %vm460, %v571, %v579
    %v587 = vsel %vm460, %v573, %v581
    %v588 = vsel %vm460, %v575, %v583
    %v589 = vsel %vm460, %v577, %v585
    %v590 = vadd.f32 %v566, %v586
    %v591 = vadd.f32 %v567, %v587
    %v592 = vadd.f32 %v568, %v588
    %v593 = vadd.f32 %v569, %v589
    %594 = vrot.lane.b32.xlu0 %v590, 124
    %v595 = vpop.permute.xlu0 %594
    %596 = vrot.lane.b32.xlu0 %v591, 124
    %v597 = vpop.permute.xlu0 %596
    %598 = vrot.lane.b32.xlu0 %v592, 124
    %v599 = vpop.permute.xlu0 %598
    %600 = vrot.lane.b32.xlu0 %v593, 124
    %v601 = vpop.permute.xlu0 %600
    %602 = vrot.lane.b32.xlu0 %v590, 4
    %v603 = vpop.permute.xlu0 %602
    %604 = vrot.lane.b32.xlu0 %v591, 4
    %v605 = vpop.permute.xlu0 %604
    %606 = vrot.lane.b32.xlu0 %v592, 4
    %v607 = vpop.permute.xlu0 %606
    %608 = vrot.lane.b32.xlu0 %v593, 4
    %v609 = vpop.permute.xlu0 %608
    %v610 = vsel %vm461, %v595, %v603
    %v611 = vsel %vm461, %v597, %v605
    %v612 = vsel %vm461, %v599, %v607
    %v613 = vsel %vm461, %v601, %v609
    %v614 = vadd.f32 %v590, %v610
    %v615 = vadd.f32 %v591, %v611
    %v616 = vadd.f32 %v592, %v612
    %v617 = vadd.f32 %v593, %v613
    %v618 = vlog2.pop %v614
    %v619 = vmul.f32 %v618, 0.6931472
    %v620 = vlog2.pop %v615
    %v621 = vmul.f32 %v620, 0.6931472
    %v622 = vlog2.pop %v616
    %v623 = vmul.f32 %v622, 0.6931472
    %v624 = vlog2.pop %v617
    %v625 = vmul.f32 %v624, 0.6931472
    %v626 = vsub.f32 %v534, %v619
    %v627 = vsub.f32 %v535, %v621
    %v628 = vsub.f32 %v536, %v623
    %v629 = vsub.f32 %v537, %v625
    %630 = vst [vmem:[%s7] sm:$0xff] %v626
    %631 = vst [vmem:[%s7 + $0x8] sm:$0xff] %v627
    %632 = vst [vmem:[%s7 + $0x10] sm:$0xff] %v628
    %633 = vst [vmem:[%s7 + $0x18] sm:$0xff] %v629
    // Predicated region
    $region42: #{_apply.1} parent=1 // pred_check
      _
    $region43: #{_apply.1} parent=1 // pred_check_branch
      %635 = sbr.rel (0) target = $region45
    $region44: #{_apply.1} parent=1 // pred_region
      _
    $region45: #{_apply.1} parent=1 // pred_fallthru
      _
    // Predicated region
    $region46: #{_apply.1} parent=1 // pred_check
      _
    $region47: #{_apply.1} parent=1 // pred_check_branch
      %637 = sbr.rel (0) target = $region49
    $region48: #{_apply.1} parent=1 // pred_region
      _
    $region49: #{_apply.1} parent=1 // pred_fallthru
      _
    %638 = vsyncpa [#allocation3], 1
    %639 = vsyncpa [#allocation5], 1

</llo_original>
